<compile_context>
chip_gen: v7x
topology: tpu7x:2x2x1
jax: 0.10.0
libtpu: 0.0.40
codegen_flags: <defaults>
</compile_context>

<pallas_src>
import functools

import jax
import jax.numpy as jnp
from jax.experimental import pallas as pl
from jax.experimental.pallas import tpu as pltpu

BN_EPSILON = 0.001


def _round_up(a, b):
    return ((a + b - 1) // b) * b


def _fused_conv_kernel(w_ref, a_ref, bias_ref, o_ref):
    """o = HSwish(W @ A + bias) for one (tn, tm) output tile.

    w_ref:    (tn, K)   BN-folded conv weights (compute dtype)
    a_ref:    (K, tm)   im2col patches, transposed (contraction dim on sublanes)
    bias_ref: (tn, 1)   BN-folded bias (f32 column)
    o_ref:    (tn, tm)  output tile (lane-dense along output pixels)
    """
    z = jnp.dot(w_ref[...], a_ref[...], preferred_element_type=jnp.float32)
    z = z + bias_ref[...]                                   # (tn, tm) + (tn, 1)
    # HSwish: x * relu6(x + 3) / 6
    o_ref[...] = (z * (jnp.clip(z + 3.0, 0.0, 6.0) * (1.0 / 6.0))).astype(o_ref.dtype)


def _build_patches_t(x, kh, kw, stride, padding, out_dtype):
    """NCHW x -> (B, K, M) with K = Cin*kh*kw (c-major, then di, dj) and M = Ho*Wo.

    Built in one pass, already transposed and in the compute dtype, so the patch matrix is
    written to HBM exactly once (and for 1x1 convs this is just a reshape + cast).
    """
    B, Cin, H, W = x.shape
    Ho = (H + 2 * padding - kh) // stride + 1
    Wo = (W + 2 * padding - kw) // stride + 1
    xp = jnp.pad(x.astype(out_dtype),
                 ((0, 0), (0, 0), (padding, padding), (padding, padding)))
    cols = []
    for di in range(kh):
        for dj in range(kw):
            cols.append(xp[:, :,
                           di:di + (Ho - 1) * stride + 1:stride,
                           dj:dj + (Wo - 1) * stride + 1:stride])   # (B, Cin, Ho, Wo)
    p = jnp.stack(cols, axis=2)                                     # (B, Cin, kh*kw, Ho, Wo)
    return p.reshape(B, Cin * kh * kw, Ho * Wo), Ho, Wo


@functools.partial(jax.jit, static_argnames=("stride", "padding", "compute_dtype"))
def conv_bn_swish(x, weight, gamma, beta, running_mean, running_var,
                  *, stride=1, padding=1, eps=BN_EPSILON,
                  compute_dtype=jnp.bfloat16):
    """x: (B, Cin, H, W); weight: (Cout, Cin, kh, kw); BN params: (Cout,). Returns NCHW."""
    B, Cin, H, W = x.shape
    Cout, _, kh, kw = weight.shape

    # ---- Fold BatchNorm (inference, running stats) into conv weight + bias ----
    scale = gamma / jnp.sqrt(running_var + eps)                     # (Cout,)
    bias = beta - running_mean * scale                              # (Cout,)
    w2 = (weight * scale[:, None, None, None]).reshape(Cout, Cin * kh * kw)
    w2 = w2.astype(compute_dtype)                                   # (N, K)
    bias_col = bias.astype(jnp.float32).reshape(Cout, 1)            # (N, 1), kept f32

    # ---- im2col, transposed, built once in the compute dtype ----
    a3, Ho, Wo = _build_patches_t(x, kh, kw, stride, padding, compute_dtype)   # (B, K, M)
    K = Cin * kh * kw
    M = Ho * Wo
    N = Cout

    # ---- Tile selection ----
    tm = 512 if M >= 512 else max(128, _round_up(M, 128))   # lane tile over output pixels
    tn = N if N <= 512 else 256                             # sublane tile over out channels

    # Keep at least 2 parallel tiles so both TensorCores are busy on v7x.
    if B * pl.cdiv(M, tm) * pl.cdiv(N, tn) < 2 and M > 128:
        tm = max(128, _round_up(pl.cdiv(M, 2), 128))

    csize = jnp.dtype(compute_dtype).itemsize

    def _vmem_bytes(tm_, tn_):  # double-buffered A / W / bias / out blocks
        return 2 * (K * tm_ * csize + tn_ * K * csize + tn_ * tm_ * 4 + tn_ * 4)

    while tm > 128 and _vmem_bytes(tm, tn) > 28 * 1024 * 1024:
        tm //= 2

    grid = (B, pl.cdiv(M, tm), pl.cdiv(N, tn))

    out3 = pl.pallas_call(
        _fused_conv_kernel,
        out_shape=jax.ShapeDtypeStruct((B, N, M), x.dtype),
        grid_spec=pltpu.PrefetchScalarGridSpec(
            num_scalar_prefetch=0,
            grid=grid,
            in_specs=[
                # Folded weights: block index constant along (b, i) -> fetched once per N-tile.
                pl.BlockSpec((tn, K), lambda b, i, j: (j, 0)),
                # Patches: each block read exactly once (single pass over A).
                pl.BlockSpec((None, K, tm), lambda b, i, j: (b, 0, i)),
                # Folded BN bias (f32 column, broadcast across lanes in the epilogue).
                pl.BlockSpec((tn, 1), lambda b, i, j: (j, 0)),
            ],
            out_specs=pl.BlockSpec((None, tn, tm), lambda b, i, j: (b, j, i)),
        ),
        compiler_params=pltpu.CompilerParams(
            dimension_semantics=("parallel", "parallel", "arbitrary"),
            vmem_limit_bytes=48 * 1024 * 1024,
        ),
    )(w2, a3, bias_col)

    # (B, Cout, Ho*Wo) -> NCHW is a free reshape (no transpose pass).
    return out3.reshape(B, Cout, Ho, Wo)


def conv_bn_swish_ref(x, weight, gamma, beta, running_mean, running_var,
                      *, stride=1, padding=1, eps=BN_EPSILON):
    """Plain-JAX reference matching the PyTorch forward (inference-mode BN)."""
    y = jax.lax.conv_general_dilated(
        x, weight, window_strides=(stride, stride),
        padding=((padding, padding), (padding, padding)),
        dimension_numbers=("NCHW", "OIHW", "NCHW"),
        precision=jax.lax.Precision.HIGHEST)
    scale = gamma / jnp.sqrt(running_var + eps)
    bias = beta - running_mean * scale
    z = y * scale[None, :, None, None] + bias[None, :, None, None]
    return z * jnp.clip(z + 3.0, 0.0, 6.0) * (1.0 / 6.0)


if __name__ == "__main__":
    # TODO(synk): BatchNorm training-mode batch statistics / running-stat (momentum) updates
    # are not implemented; the kernel implements the inference-mode forward pass.
    B, Cin, H, W = 2, 4, 16, 16
    Cout, ksz, stride, padding = 8, 3, 1, 1

    key = jax.random.PRNGKey(0)
    kx, kw_, kg, kb, km, kv = jax.random.split(key, 6)
    x = jax.random.normal(kx, (B, Cin, H, W), dtype=jnp.float32)
    weight = 0.2 * jax.random.normal(kw_, (Cout, Cin, ksz, ksz), dtype=jnp.float32)
    gamma = 1.0 + 0.1 * jax.random.normal(kg, (Cout,), dtype=jnp.float32)
    beta = 0.1 * jax.random.normal(kb, (Cout,), dtype=jnp.float32)
    running_mean = 0.05 * jax.random.normal(km, (Cout,), dtype=jnp.float32)
    running_var = jnp.abs(1.0 + 0.1 * jax.random.normal(kv, (Cout,), dtype=jnp.float32))

    ref = conv_bn_swish_ref(x, weight, gamma, beta, running_mean, running_var,
                            stride=stride, padding=padding)

    # Default fast path: bf16 operands, f32 MXU accumulation.
    out = conv_bn_swish(x, weight, gamma, beta, running_mean, running_var,
                        stride=stride, padding=padding)
    out = jax.block_until_ready(out)
    assert out.shape == (B, Cout, H, W), out.shape
    assert jnp.allclose(out, ref, atol=5e-2, rtol=5e-2), (
        "bf16 path mismatch, max err %e" % float(jnp.max(jnp.abs(out - ref))))

    # f32 path: tight numerical check of the kernel machinery itself.
    out_f32 = conv_bn_swish(x, weight, gamma, beta, running_mean, running_var,
                            stride=stride, padding=padding,
                            compute_dtype=jnp.float32)
    out_f32 = jax.block_until_ready(out_f32)
    assert jnp.allclose(out_f32, ref, atol=1e-4, rtol=1e-4), (
        "f32 path mismatch, max err %e" % float(jnp.max(jnp.abs(out_f32 - ref))))

    print("KERNEL_OK")
</pallas_src>

<mosaic_0001>
module attributes {stable_mosaic.version = 11 : i64} {
  func.func @_fused_conv_kernel(%arg0: i32, %arg1: i32, %arg2: i32, %arg3: memref<8x36xbf16, #tpu.memory_space<vmem>>, %arg4: memref<1x36x256xbf16, #tpu.memory_space<vmem>>, %arg5: memref<8x1xf32, #tpu.memory_space<vmem>>, %arg6: memref<1x8x256xf32, #tpu.memory_space<vmem>>) attributes {dimension_semantics = [#tpu.dimension_semantics<parallel>, #tpu.dimension_semantics<parallel>, #tpu.dimension_semantics<arbitrary>], iteration_bounds = array<i64: 2, 1, 1>, scalar_prefetch = 0 : i64, scratch_operands = 0 : i64, tpu.core_type = #tpu.core_type<tc>, window_params = [{transform_indices = @transform_0, window_bounds = array<i64: 8, 36>}, {transform_indices = @transform_1, window_bounds = array<i64: 1, 36, 256>}, {transform_indices = @transform_2, window_bounds = array<i64: 8, 1>}, {transform_indices = @transform_3, window_bounds = array<i64: 1, 8, 256>}]} {
    %c0 = arith.constant 0 : index
    %c0_0 = arith.constant 0 : index
    %0 = vector.load %arg3[%c0, %c0_0] : memref<8x36xbf16, #tpu.memory_space<vmem>>, vector<8x36xbf16>
    %c0_1 = arith.constant 0 : index
    %c0_2 = arith.constant 0 : index
    %c0_3 = arith.constant 0 : index
    %1 = vector.load %arg4[%c0_1, %c0_2, %c0_3] : memref<1x36x256xbf16, #tpu.memory_space<vmem>>, vector<1x36x256xbf16>
    %2 = vector.shape_cast %1 : vector<1x36x256xbf16> to vector<36x256xbf16>
    %cst = arith.constant dense<0.000000e+00> : vector<8x256xf32>
    %3 = tpu.matmul %0, %2, %cst {dimension_numbers = #tpu.dot_dimension_numbers<[1], [0], [0], [1], [0, 0, 1, 1], [], []>} : vector<8x36xbf16>, vector<36x256xbf16>, vector<8x256xf32> -> vector<8x256xf32>
    %c0_4 = arith.constant 0 : index
    %c0_5 = arith.constant 0 : index
    %4 = vector.load %arg5[%c0_4, %c0_5] : memref<8x1xf32, #tpu.memory_space<vmem>>, vector<8x1xf32>
    %5 = vector.broadcast %4 : vector<8x1xf32> to vector<8x256xf32>
    %6 = arith.addf %3, %5 : vector<8x256xf32>
    %cst_6 = arith.constant 3.000000e+00 : f32
    %7 = vector.broadcast %cst_6 : f32 to vector<8x256xf32>
    %8 = arith.addf %6, %7 : vector<8x256xf32>
    %cst_7 = arith.constant 0.000000e+00 : f32
    %cst_8 = arith.constant 6.000000e+00 : f32
    %9 = vector.broadcast %cst_7 : f32 to vector<8x256xf32>
    %10 = arith.maximumf %9, %8 : vector<8x256xf32>
    %11 = vector.broadcast %cst_8 : f32 to vector<8x256xf32>
    %12 = arith.minimumf %11, %10 : vector<8x256xf32>
    %cst_9 = arith.constant 0.166666672 : f32
    %13 = vector.broadcast %cst_9 : f32 to vector<8x256xf32>
    %14 = arith.mulf %12, %13 : vector<8x256xf32>
    %15 = arith.mulf %6, %14 : vector<8x256xf32>
    %c0_10 = arith.constant 0 : index
    %c0_11 = arith.constant 0 : index
    %c0_12 = arith.constant 0 : index
    %16 = vector.load %arg6[%c0_10, %c0_11, %c0_12] : memref<1x8x256xf32, #tpu.memory_space<vmem>>, vector<1x8x256xf32>
    %17 = vector.shape_cast %16 : vector<1x8x256xf32> to vector<8x256xf32>
    %18 = vector.shape_cast %15 : vector<8x256xf32> to vector<1x8x256xf32>
    tpu.vector_store %arg6[%c0_10, %c0_11, %c0_12], %18 {strides = array<i32>} : memref<1x8x256xf32, #tpu.memory_space<vmem>>, vector<1x8x256xf32>,
    return
  }
  func.func @transform_0(%arg0: i32, %arg1: i32, %arg2: i32) -> (i32, i32) {
    %c0_i32 = arith.constant 0 : i32
    %c0_i32_0 = arith.constant 0 : i32
    return %arg2, %c0_i32 : i32, i32
  }
  func.func @transform_1(%arg0: i32, %arg1: i32, %arg2: i32) -> (i32, i32, i32) {
    %c0_i32 = arith.constant 0 : i32
    %c0_i32_0 = arith.constant 0 : i32
    return %arg0, %c0_i32, %arg1 : i32, i32, i32
  }
  func.func @transform_2(%arg0: i32, %arg1: i32, %arg2: i32) -> (i32, i32) {
    %c0_i32 = arith.constant 0 : i32
    %c0_i32_0 = arith.constant 0 : i32
    return %arg2, %c0_i32 : i32, i32
  }
  func.func @transform_3(%arg0: i32, %arg1: i32, %arg2: i32) -> (i32, i32, i32) {
    %c0_i32 = arith.constant 0 : i32
    return %arg0, %arg2, %arg1 : i32, i32, i32
  }
}

</mosaic_0001>

<llo_original>
// kernel: conv_bn_swish.1
$region0: #{conv_bn_swish.1}
  #allocation0 [shape = 'u32[]', space=smem, size = 0x4, offset = 0x4, fixed_abs, tag = 'smem constant byte address 0x4 - core index']
  #allocation1 [shape = 'u32[144,128]{1,0:T(1,128)}', space=vmem, size = 0x12000, scoped, tag = 'internal scratch']
  %s0 = inlined_call_operand.vmem [shape: bf16[8,36], index: 0, kind: input, shape index: {}]
  %s1 = inlined_call_operand.vmem [shape: bf16[2,36,256], index: 1, kind: input, shape index: {}]
  %s2 = inlined_call_operand.vmem [shape: f32[8,1], index: 2, kind: input, shape index: {}]
  %s3 = inlined_call_operand.vmem [shape: f32[2,8,256], index: 3, kind: output, shape index: {}]
  %s4 = sld [smem:[#allocation0]]
  $region45: #{conv_bn_swish.1} parent=0
    _
  %s6 = ssub.s32 1, %s4
  %s7 = scalar_select 0, %s6, %s4
  loop: start=0, step=1, limit=4
  $region2: #{conv_bn_swish.1} parent=0 // loop_pre_header
    _
  $region3: #{conv_bn_swish.1} parent=0 // loop_header
    %s9 = sphi 0, %s13
    %p10 = scmp.ge.s32.totalorder %s9, 4
    %s16 = sphi 0, %s35
    %s17 = sphi 0, %s31
    %s18 = sphi 0, %s27
    %s19 = sphi 0, %s16
    %s20 = sphi 0, %s17
    %s21 = sphi 0, %s18
    %s22 = sphi 0, %s19
    %s23 = sphi 0, %s20
    %s24 = sphi 0, %s21
    %s38 = sphi 0, %s40
    %s41 = sphi 0, %s38
    %s42 = sphi 0, %s41
    %s58 = sphi 0, %s42
    %s66 = sphi 0, %s68
    %s69 = sphi 0, %s66
    %s70 = sphi 0, %s69
    %s86 = sphi 0, %s70
    %s92 = sphi 0, %s94
    %s95 = sphi 0, %s92
    %s96 = sphi 0, %s95
    %s112 = sphi 0, %s96
    %s122 = sphi 0, %s124
    %s125 = sphi 0, %s122
    %s126 = sphi 0, %s125
    %s142 = sphi 0, %s126
  $region4: #{conv_bn_swish.1} parent=0 // loop_header_branch
    %12 = sbr.rel (%p10) target = $region8
  $region5: #{conv_bn_swish.1} parent=0 // loop_body
    %s14 = ssub.s32 %s9, 1
    %s15 = ssub.s32 %s9, 2
    %s25 = sadd.s32 1, %s18
    %p26 = scmp.ge.s32.totalorder %s25, 1
    %s27 = scalar_select %p26, 0, %s25
    %s28 = sadd.s32 1, %s17
    %s29 = scalar_select %p26, %s28, %s17
    %p30 = scmp.ge.s32.totalorder %s29, 1
    %s31 = scalar_select %p30, 0, %s29
    %s32 = sadd.s32 1, %s16
    %s33 = scalar_select %p30, %s32, %s16
    %p34 = scmp.ge.s32.totalorder %s33, 2
    %s35 = scalar_select %p34, 0, %s33
    %s36 = ssub.s32 %s18, %s27
    %p37 = scmp.eq.s32.totalorder %s36, 0
    %s39 = sadd.s32 %s38, 1
    %s40 = scalar_select %p37, %s38, %s39
    %p43 = pneg %p37
    %p44 = scmp.eq.s32.totalorder %s9, 1
    %p45 = por %p43, %p44
    %p46 = scmp.ne.s32.totalorder %s38, %s41
    %p47 = scmp.eq.s32.totalorder %s9, 0
    %p48 = por %p46, %p47
    %p49 = scmp.ne.s32.totalorder %s38, %s41
    %p50 = scmp.eq.s32.totalorder %s14, 1
    %p51 = por %p49, %p50
    %p52 = scmp.ne.s32.totalorder %s41, %s42
    %p53 = scmp.eq.s32.totalorder %s14, 0
    %p54 = por %p52, %p53
    %p55 = scmp.ne.s32.totalorder %s41, %s42
    %p56 = scmp.eq.s32.totalorder %s15, 1
    %p57 = por %p55, %p56
    %p59 = scmp.ne.s32.totalorder %s42, %s58
    %p60 = scmp.eq.s32.totalorder %s15, 0
    %p61 = por %p59, %p60
    %s62 = ssub.s32 %s16, %s35
    %s63 = ssub.s32 %s17, %s31
    %s64 = sor.u32 %s62, %s63
    %p65 = scmp.eq.s32.totalorder %s64, 0
    %s67 = sadd.s32 %s66, 1
    %s68 = scalar_select %p65, %s66, %s67
    %p71 = pneg %p65
    %p72 = scmp.eq.s32.totalorder %s9, 1
    %p73 = por %p71, %p72
    %p74 = scmp.ne.s32.totalorder %s66, %s69
    %p75 = scmp.eq.s32.totalorder %s9, 0
    %p76 = por %p74, %p75
    %p77 = scmp.ne.s32.totalorder %s66, %s69
    %p78 = scmp.eq.s32.totalorder %s14, 1
    %p79 = por %p77, %p78
    %p80 = scmp.ne.s32.totalorder %s69, %s70
    %p81 = scmp.eq.s32.totalorder %s14, 0
    %p82 = por %p80, %p81
    %p83 = scmp.ne.s32.totalorder %s69, %s70
    %p84 = scmp.eq.s32.totalorder %s15, 1
    %p85 = por %p83, %p84
    %p87 = scmp.ne.s32.totalorder %s70, %s86
    %p88 = scmp.eq.s32.totalorder %s15, 0
    %p89 = por %p87, %p88
    %s90 = ssub.s32 %s18, %s27
    %p91 = scmp.eq.s32.totalorder %s90, 0
    %s93 = sadd.s32 %s92, 1
    %s94 = scalar_select %p91, %s92, %s93
    %p97 = pneg %p91
    %p98 = scmp.eq.s32.totalorder %s9, 1
    %p99 = por %p97, %p98
    %p100 = scmp.ne.s32.totalorder %s92, %s95
    %p101 = scmp.eq.s32.totalorder %s9, 0
    %p102 = por %p100, %p101
    %p103 = scmp.ne.s32.totalorder %s92, %s95
    %p104 = scmp.eq.s32.totalorder %s14, 1
    %p105 = por %p103, %p104
    %p106 = scmp.ne.s32.totalorder %s95, %s96
    %p107 = scmp.eq.s32.totalorder %s14, 0
    %p108 = por %p106, %p107
    %p109 = scmp.ne.s32.totalorder %s95, %s96
    %p110 = scmp.eq.s32.totalorder %s15, 1
    %p111 = por %p109, %p110
    %p113 = scmp.ne.s32.totalorder %s96, %s112
    %p114 = scmp.eq.s32.totalorder %s15, 0
    %p115 = por %p113, %p114
    %s116 = ssub.s32 %s16, %s35
    %s117 = ssub.s32 %s18, %s27
    %s118 = sor.u32 %s116, %s117
    %s119 = ssub.s32 %s17, %s31
    %s120 = sor.u32 %s118, %s119
    %p121 = scmp.eq.s32.totalorder %s120, 0
    %s123 = sadd.s32 %s122, 1
    %s124 = scalar_select %p121, %s122, %s123
    %p127 = pneg %p121
    %p128 = scmp.eq.s32.totalorder %s9, 1
    %p129 = por %p127, %p128
    %p130 = scmp.ne.s32.totalorder %s122, %s125
    %p131 = scmp.eq.s32.totalorder %s9, 0
    %p132 = por %p130, %p131
    %p133 = scmp.ne.s32.totalorder %s122, %s125
    %p134 = scmp.eq.s32.totalorder %s14, 1
    %p135 = por %p133, %p134
    %p136 = scmp.ne.s32.totalorder %s125, %s126
    %p137 = scmp.eq.s32.totalorder %s14, 0
    %p138 = por %p136, %p137
    %p139 = scmp.ne.s32.totalorder %s125, %s126
    %p140 = scmp.eq.s32.totalorder %s15, 1
    %p141 = por %p139, %p140
    %p143 = scmp.ne.s32.totalorder %s126, %s142
    %p144 = scmp.eq.s32.totalorder %s15, 0
    %p145 = por %p143, %p144
    %p146 = scmp.le.s32.totalorder 1, %s9
    %p147 = scmp.lt.s32.totalorder %s9, 3
    %p148 = pnand %p146, %p147
    %p149 = pneg %p148
    // Predicated region
    $region9: #{conv_bn_swish.1} parent=5 // pred_check
      _
    $region10: #{conv_bn_swish.1} parent=5 // pred_check_branch
      %151 = sbr.rel (%p148) target = $region12
    $region11: #{conv_bn_swish.1} parent=5 // pred_region
      %s152 = ssub.s32 %s9, 1
      // Predicated region
      $region13: #{conv_bn_swish.1} parent=11 // pred_check
        %p153 = pneg %p54
      $region14: #{conv_bn_swish.1} parent=11 // pred_check_branch
        %155 = sbr.rel (%p153) target = $region16
      $region15: #{conv_bn_swish.1} parent=11 // pred_region
        %p156 = scmp.lt.s32.totalorder %s21, 0
        %s157 = scalar_select %p156, %s21, 0
        %s158 = smul.addr %s157, 4
        %s159 = scalar_lea.vmem %s0, %s158
      $region16: #{conv_bn_swish.1} parent=11 // pred_fallthru
        _
      // Predicated region
      $region17: #{conv_bn_swish.1} parent=11 // pred_check
        %p160 = pneg %p108
      $region18: #{conv_bn_swish.1} parent=11 // pred_check_branch
        %162 = sbr.rel (%p160) target = $region20
      $region19: #{conv_bn_swish.1} parent=11 // pred_region
        %p163 = scmp.lt.s32.totalorder %s21, 0
        %s164 = scalar_select %p163, %s21, 0
        %s165 = smul.addr %s164, 8
        %s166 = scalar_lea.vmem %s2, %s165
      $region20: #{conv_bn_swish.1} parent=11 // pred_fallthru
        _
    $region12: #{conv_bn_swish.1} parent=5 // pred_fallthru
      _
    %p167 = scmp.lt.s32.totalorder %s9, 2
    // Predicated region
    $region21: #{conv_bn_swish.1} parent=5 // pred_check
      %p168 = pneg %p167
    $region22: #{conv_bn_swish.1} parent=5 // pred_check_branch
      %170 = sbr.rel (%p168) target = $region24
    $region23: #{conv_bn_swish.1} parent=5 // pred_region
      // Predicated region
      $region25: #{conv_bn_swish.1} parent=23 // pred_check
        %p171 = pneg %p76
      $region26: #{conv_bn_swish.1} parent=23 // pred_check_branch
        %173 = sbr.rel (%p171) target = $region28
      $region27: #{conv_bn_swish.1} parent=23 // pred_region
        %s174 = smul.u32 2, %s17
        %p175 = scmp.lt.s32.totalorder %s16, 1
        %s176 = scalar_select %p175, %s16, 1
        %p177 = scmp.lt.s32.totalorder %s174, 1
        %s178 = scalar_select %p177, %s174, 1
        %s179 = smul.addr %s176, 10
        %s180 = sadd.s32 %s178, %s179
        %s181 = smul.addr %s180, 4
        %s182 = scalar_lea.vmem %s1, %s181
        %s183 = smul.u32 2, %s17
      $region28: #{conv_bn_swish.1} parent=23 // pred_fallthru
        _
    $region24: #{conv_bn_swish.1} parent=5 // pred_fallthru
      _
    %p184 = scmp.le.s32.totalorder 1, %s9
    %p185 = scmp.lt.s32.totalorder %s9, 3
    %p186 = pnand %p184, %p185
    %p187 = pneg %p186
    // Predicated region
    $region29: #{conv_bn_swish.1} parent=5 // pred_check
      _
    $region30: #{conv_bn_swish.1} parent=5 // pred_check_branch
      %189 = sbr.rel (%p186) target = $region32
    $region31: #{conv_bn_swish.1} parent=5 // pred_region
      %s190 = ssub.s32 %s9, 1
      %p191 = scmp.lt.s32.totalorder %s21, 0
      %s192 = scalar_select %p191, %s21, 0
      %s193 = smul.addr %s192, 4
      %s194 = scalar_lea.vmem %s0, %s193
      %p195 = pneg %p54
      %p196 = pneg %p51
      %s197 = smul.u32 2, %s20
      %p198 = scmp.lt.s32.totalorder %s19, 1
      %s199 = scalar_select %p198, %s19, 1
      %p200 = scmp.lt.s32.totalorder %s197, 1
      %s201 = scalar_select %p200, %s197, 1
      %s202 = smul.addr %s199, 10
      %s203 = sadd.s32 %s201, %s202
      %s204 = smul.addr %s203, 4
      %s205 = scalar_lea.vmem %s1, %s204
      %p206 = pneg %p82
      %p207 = pneg %p79
      %p208 = scmp.lt.s32.totalorder %s21, 0
      %s209 = scalar_select %p208, %s21, 0
      %s210 = smul.addr %s209, 8
      %s211 = scalar_lea.vmem %s2, %s210
      %p212 = pneg %p108
      %p213 = pneg %p105
      %p214 = pneg %p138
      %p215 = pneg %p135
      %s216 = smul.u32 2, %s20
      %p217 = scmp.lt.s32.totalorder %s19, 1
      %s218 = scalar_select %p217, %s19, 1
      %p219 = scmp.lt.s32.totalorder %s21, 0
      %s220 = scalar_select %p219, %s21, 0
      %p221 = scmp.lt.s32.totalorder %s216, 1
      %s222 = scalar_select %p221, %s216, 1
      %s223 = smul.addr %s220, 2
      %s224 = sadd.s32 %s222, %s223
      %s225 = smul.addr %s218, 2
      %s226 = sadd.s32 %s224, %s225
      %s227 = smul.addr %s226, 8
      %s228 = scalar_lea.vmem %s3, %s227
      %p229 = scmp.lt.s32.totalorder %s21, 0
      %s230 = scalar_select %p229, %s21, 0
      %s231 = smul.addr %s230, 4
      %s232 = scalar_lea.vmem %s0, %s231
      %s233 = smul.u32 2, %s20
      %p234 = scmp.lt.s32.totalorder %s19, 1
      %s235 = scalar_select %p234, %s19, 1
      %p236 = scmp.lt.s32.totalorder %s233, 1
      %s237 = scalar_select %p236, %s233, 1
      %s238 = smul.addr %s235, 10
      %s239 = sadd.s32 %s237, %s238
      %s240 = smul.addr %s239, 4
      %s241 = scalar_lea.vmem %s1, %s240
      %s242 = smul.u32 2, %s20
      %p243 = scmp.lt.s32.totalorder %s21, 0
      %s244 = scalar_select %p243, %s21, 0
      %s245 = smul.addr %s244, 8
      %s246 = scalar_lea.vmem %s2, %s245
      %s247 = smul.u32 2, %s20
      %p248 = scmp.lt.s32.totalorder %s19, 1
      %s249 = scalar_select %p248, %s19, 1
      %p250 = scmp.lt.s32.totalorder %s21, 0
      %s251 = scalar_select %p250, %s21, 0
      %p252 = scmp.lt.s32.totalorder %s247, 1
      %s253 = scalar_select %p252, %s247, 1
      %s254 = smul.addr %s251, 2
      %s255 = sadd.s32 %s253, %s254
      %s256 = smul.addr %s249, 2
      %s257 = sadd.s32 %s255, %s256
      %s258 = smul.addr %s257, 8
      %s259 = scalar_lea.vmem %s3, %s258
      %s260 = smul.u32 2, %s20
      %v262 = vld [vmem:[%s232] sm:$0xf]
      %v263 = vld [vmem:[%s241] sm:$0xff]
      %v264 = vld [vmem:[%s241 + $0x8] sm:$0xff]
      %v265 = vld [vmem:[%s241 + $0x10] sm:$0xff]
      %v266 = vld [vmem:[%s241 + $0x18] sm:$0xff]
      %v267 = vld [vmem:[%s241 + $0x20] sm:$0x33]
      %v268 = vld [vmem:[%s246] sm:$0xff]
      %270 = vset.pattern.permute.xlu0 0
      %271 = vperm.xlu0 %270, %v268
      %v272 = vpop.permute.xlu0 %271
      %v279 = vunpack.c.l.b16 %v263
      %v280 = vunpack.c.h.b16 %v263
      %v281 = vunpack.c.l.b16 %v264
      %v282 = vunpack.c.h.b16 %v264
      %v283 = vunpack.c.l.b16 %v265
      %v284 = vunpack.c.h.b16 %v265
      %v285 = vunpack.c.l.b16 %v266
      %v286 = vunpack.c.h.b16 %v266
      %v287 = vunpack.c.l.b16 %v267
      %v288 = vunpack.c.h.b16 %v267
      %v289 = vpack.c.b16 %v281, %v279
      %v290 = vpack.c.b16 %v282, %v280
      %v291 = vpack.c.b16 %v285, %v283
      %v292 = vpack.c.b16 %v286, %v284
      %v293 = vpack.c.b16 %v287, %v287
      %v294 = vpack.c.b16 %v288, %v288
      %vm299 = vcmask 293888
      %v301 = vsel %vm299, %v262, 0
      %vm303 = vcmask 1041408
      %v305 = vsel %vm303, %v293, 0
      %v308 = vsel %vm303, %v294, 0
      %310 = vmatprep.subr.bf16.mxu0 %v290
      %311 = vmatpush1.bf16.msra.mxu0 %v289
      %312 = vmatprep.subr.bf16.mxu0 %v292
      %313 = vmatpush1.bf16.msra.mxu0 %v291
      %314 = vmatprep.subr.bf16.mxu0 %v308
      %315 = vmatpush1.bf16.msra.mxu0 %v305
      %316 = vmatprep.subr.bf16.mxu0 0
      %317 = vmatpush1.bf16.msra.mxu0 0
      %318 = vmatprep.subr.bf16.mxu0 0
      %319 = vmatpush1.bf16.msra.mxu0 0
      %320 = vmatprep.subr.bf16.mxu0 0
      %321 = vmatpush1.bf16.msra.mxu0 0
      %322 = vmatprep.subr.bf16.mxu0 0
      %323 = vmatpush1.bf16.msra.mxu0 0
      %324 = vmatprep.subr.bf16.mxu0 0
      %325 = vmatpush1.bf16.msra.mxu0 0
      %326 = vmatprep.subr.bf16.mxu0 0
      %327 = vmatpush1.bf16.msra.mxu0 0
      %328 = vmatprep.subr.bf16.mxu0 0
      %329 = vmatpush1.bf16.msra.mxu0 0
      %330 = vmatprep.subr.bf16.mxu0 0
      %331 = vmatpush1.bf16.msra.mxu0 0
      %332 = vmatprep.subr.bf16.mxu0 0
      %333 = vmatpush1.bf16.msra.mxu0 0
      %334 = vmatprep.subr.bf16.mxu0 0
      %335 = vmatpush1.bf16.msra.mxu0 0
      %336 = vmatprep.subr.bf16.mxu0 0
      %337 = vmatpush1.bf16.msra.mxu0 0
      %338 = vmatprep.subr.bf16.mxu0 0
      %339 = vmatpush1.bf16.msra.mxu0 0
      %340 = vmatprep.subr.bf16.mxu0 0
      %341 = vmatpush1.bf16.msra.mxu0 0
      %342 = vmatprep.mubr.bf16.mxu0 0
      %343 = vmatmul.mubr.bf16.gmra.mrb[0].mxu0 %v301
      %v344 = vpop.f32.mrb[0].mxu0
      %v345 = vadd.f32 %v272, %v344
      %v346 = vpop.f32.mrb[0].mxu0
      %v347 = vadd.f32 %v272, %v346
      %v348 = vpop.f32.mrb[0].mxu0
      %v349 = vpop.f32.mrb[0].mxu0
      %350 = vdwg.mxu0
      %v351 = vadd.f32 %v345, 3.0
      %v352 = vadd.f32 %v347, 3.0
      %v353 = vmax.f32 %v351, 0.0
      %v354 = vmax.f32 %v352, 0.0
      %v355 = vmin.f32 %v353, 6.0
      %v356 = vmin.f32 %v354, 6.0
      %v357 = vmul.f32 %v355, 0.16666667
      %v358 = vmul.f32 %v356, 0.16666667
      %v359 = vmul.f32 %v345, %v357
      %v360 = vmul.f32 %v347, %v358
      %361 = vst [vmem:[%s259] sm:$0xff] %v359
      %362 = vst [vmem:[%s259 + $0x8] sm:$0xff] %v360
      %s363 = smul.u32 2, %s20
      %p364 = scmp.lt.s32.totalorder %s19, 1
      %s365 = scalar_select %p364, %s19, 1
      %p366 = scmp.lt.s32.totalorder %s21, 0
      %s367 = scalar_select %p366, %s21, 0
      %p368 = scmp.lt.s32.totalorder %s363, 1
      %s369 = scalar_select %p368, %s363, 1
      %s370 = smul.addr %s367, 2
      %s371 = sadd.s32 %s369, %s370
      %s372 = smul.addr %s365, 2
      %s373 = sadd.s32 %s371, %s372
      %s374 = smul.addr %s373, 8
      %s375 = scalar_lea.vmem %s3, %s374
      // Predicated region
      $region33: #{conv_bn_swish.1} parent=31 // pred_check
        %p376 = pneg %p135
      $region34: #{conv_bn_swish.1} parent=31 // pred_check_branch
        %378 = sbr.rel (%p376) target = $region36
      $region35: #{conv_bn_swish.1} parent=31 // pred_region
        %s379 = smul.u32 2, %s20
      $region36: #{conv_bn_swish.1} parent=31 // pred_fallthru
        _
    $region32: #{conv_bn_swish.1} parent=5 // pred_fallthru
      _
    %p380 = scmp.le.s32.totalorder 2, %s9
    // Predicated region
    $region37: #{conv_bn_swish.1} parent=5 // pred_check
      %p381 = pneg %p380
    $region38: #{conv_bn_swish.1} parent=5 // pred_check_branch
      %383 = sbr.rel (%p381) target = $region40
    $region39: #{conv_bn_swish.1} parent=5 // pred_region
      %s384 = ssub.s32 %s9, 2
      // Predicated region
      $region41: #{conv_bn_swish.1} parent=39 // pred_check
        %p385 = pneg %p141
      $region42: #{conv_bn_swish.1} parent=39 // pred_check_branch
        %387 = sbr.rel (%p385) target = $region44
      $region43: #{conv_bn_swish.1} parent=39 // pred_region
        %s388 = smul.u32 2, %s23
        %p389 = scmp.lt.s32.totalorder %s22, 1
        %s390 = scalar_select %p389, %s22, 1
        %p391 = scmp.lt.s32.totalorder %s24, 0
        %s392 = scalar_select %p391, %s24, 0
        %p393 = scmp.lt.s32.totalorder %s388, 1
        %s394 = scalar_select %p393, %s388, 1
        %s395 = smul.addr %s392, 2
        %s396 = sadd.s32 %s394, %s395
        %s397 = smul.addr %s390, 2
        %s398 = sadd.s32 %s396, %s397
        %s399 = smul.addr %s398, 8
        %s400 = scalar_lea.vmem %s3, %s399
      $region44: #{conv_bn_swish.1} parent=39 // pred_fallthru
        _
    $region40: #{conv_bn_swish.1} parent=5 // pred_fallthru
      _
  $region6: #{conv_bn_swish.1} parent=0 // loop_footer
    %s13 = sadd.s32 1, %s9
  $region7: #{conv_bn_swish.1} parent=0 // loop_footer_branch
    %8 = sbr.rel target = $region3
  $region8: #{conv_bn_swish.1} parent=0 // loop_exit
    _

</llo_original>
